<compile_context>
chip_gen: v7x
topology: tpu7x:2x2x1
jax: 0.10.0
libtpu: 0.0.40
codegen_flags: <defaults>
</compile_context>

<pallas_src>
import jax
import jax.numpy as jnp
from jax.experimental import pallas as pl
from jax.experimental.pallas import tpu as pltpu

_LANES = 128


def _leftside_kernel(params_ref, obj_ref, x_ref, out_ref):
    # params_ref : (2,)              f32 in SMEM  -> [weight, bias]
    # obj_ref    : (tile_rows, 128)  VMEM         -> objectness lanes
    # x_ref      : (tile_rows, 128)  VMEM         -> x-coordinate lanes
    # out_ref    : (tile_rows, 128)  VMEM         -> lane-dense output
    w = params_ref[0]
    b = params_ref[1]
    x = x_ref[...].astype(jnp.float32)
    obj = obj_ref[...].astype(jnp.float32)
    prob = jax.nn.sigmoid(x * w + b)          # EUP transcendental, f32 compute
    out_ref[...] = (prob * obj).astype(out_ref.dtype)


def slot_attention_leftside_valuation(z, weight, bias, *, max_tile_rows=512):
    """sigmoid(weight * z[:, 1] + bias) * z[:, 0] via a Pallas TPU kernel."""
    assert z.ndim == 2 and z.shape[1] >= 2, "z must be (B, D) with D >= 2"
    B = z.shape[0]
    dtype = z.dtype

    # --- lane-dense layout: pad batch to rows of 128 lanes ------------------
    rows = -(-B // _LANES)                 # rows of 128 covering the batch
    rows8 = -(-rows // 8) * 8              # sublane-align row count
    tile_rows = min(max_tile_rows, rows8)  # per-step tile (multiple of 8)
    grid_n = -(-rows8 // tile_rows)
    padded_rows = grid_n * tile_rows
    padded_b = padded_rows * _LANES

    # Slice the two needed columns upstream (XLA fuses this); pad + reshape so
    # the kernel sees full-width (tile_rows, 128) vreg tiles.
    obj = jnp.zeros((padded_b,), dtype).at[:B].set(z[:, 0]).reshape(
        padded_rows, _LANES)
    x_c = jnp.zeros((padded_b,), dtype).at[:B].set(z[:, 1]).reshape(
        padded_rows, _LANES)
    params = jnp.stack([jnp.asarray(weight, jnp.float32).reshape(()),
                        jnp.asarray(bias, jnp.float32).reshape(())])  # (2,)

    out = pl.pallas_call(
        _leftside_kernel,
        out_shape=jax.ShapeDtypeStruct((padded_rows, _LANES), dtype),
        grid_spec=pltpu.PrefetchScalarGridSpec(
            num_scalar_prefetch=0,
            grid=(grid_n,),
            in_specs=[
                # weight/bias scalars live in SMEM, untiled.
                pl.BlockSpec(memory_space=pltpu.MemorySpace.SMEM),
                pl.BlockSpec((tile_rows, _LANES), lambda i: (i, 0)),
                pl.BlockSpec((tile_rows, _LANES), lambda i: (i, 0)),
            ],
            out_specs=pl.BlockSpec((tile_rows, _LANES), lambda i: (i, 0)),
        ),
        compiler_params=pltpu.CompilerParams(
            dimension_semantics=("parallel",),   # independent batch tiles
        ),
    )(params, obj, x_c)

    # Drop the padding and return the PyTorch-shaped (B,) result.
    return out.reshape(padded_b)[:B]


def _reference(z, weight, bias):
    return jax.nn.sigmoid(z[:, 1] * weight + bias) * z[:, 0]


if __name__ == "__main__":
    key = jax.random.PRNGKey(0)
    kz, kw, kb = jax.random.split(key, 3)

    B, D = 8, 19
    # z: (B, 19) slot-attention object-centric representation
    z = jax.random.uniform(kz, (B, D), dtype=jnp.float32)
    # LogisticRegression(1, 1) parameters (weight scalar, bias scalar)
    weight = jax.random.normal(kw, (), dtype=jnp.float32)
    bias = jax.random.normal(kb, (), dtype=jnp.float32)

    out = slot_attention_leftside_valuation(z, weight, bias)
    out = jax.block_until_ready(out)

    ref = _reference(z, weight, bias)
    assert out.shape == (B,), out.shape
    assert jnp.allclose(out, ref, atol=1e-6, rtol=1e-6), (out, ref)

    print("KERNEL_OK")
</pallas_src>

<mosaic_0001>
module attributes {stable_mosaic.version = 11 : i64} {
  func.func @_leftside_kernel(%arg0: i32, %arg1: memref<2xf32, #tpu.memory_space<smem>>, %arg2: memref<8x128xf32, #tpu.memory_space<vmem>>, %arg3: memref<8x128xf32, #tpu.memory_space<vmem>>, %arg4: memref<8x128xf32, #tpu.memory_space<vmem>>) attributes {dimension_semantics = [#tpu.dimension_semantics<parallel>], iteration_bounds = array<i64: 1>, scalar_prefetch = 0 : i64, scratch_operands = 0 : i64, tpu.core_type = #tpu.core_type<tc>, window_params = [{transform_indices = @transform_0, window_bounds = array<i64: 2>}, {transform_indices = @transform_1, window_bounds = array<i64: 8, 128>}, {transform_indices = @transform_2, window_bounds = array<i64: 8, 128>}, {transform_indices = @transform_3, window_bounds = array<i64: 8, 128>}]} {
    %c0 = arith.constant 0 : index
    %0 = memref.load %arg1[%c0] : memref<2xf32, #tpu.memory_space<smem>>
    %c1 = arith.constant 1 : index
    %1 = memref.load %arg1[%c1] : memref<2xf32, #tpu.memory_space<smem>>
    %c0_0 = arith.constant 0 : index
    %c0_1 = arith.constant 0 : index
    %2 = vector.load %arg3[%c0_0, %c0_1] : memref<8x128xf32, #tpu.memory_space<vmem>>, vector<8x128xf32>
    %c0_2 = arith.constant 0 : index
    %c0_3 = arith.constant 0 : index
    %3 = vector.load %arg2[%c0_2, %c0_3] : memref<8x128xf32, #tpu.memory_space<vmem>>, vector<8x128xf32>
    %4 = vector.broadcast %0 : f32 to vector<8x128xf32>
    %5 = arith.mulf %2, %4 : vector<8x128xf32>
    %6 = vector.broadcast %1 : f32 to vector<8x128xf32>
    %7 = arith.addf %5, %6 : vector<8x128xf32>
    %8 = arith.negf %7 : vector<8x128xf32>
    %9 = math.exp %8 : vector<8x128xf32>
    %cst = arith.constant 1.000000e+00 : f32
    %10 = vector.broadcast %cst : f32 to vector<8x128xf32>
    %11 = arith.addf %10, %9 : vector<8x128xf32>
    %12 = arith.divf %10, %11 : vector<8x128xf32>
    %13 = arith.mulf %12, %3 : vector<8x128xf32>
    %c0_4 = arith.constant 0 : index
    %c0_5 = arith.constant 0 : index
    %14 = vector.load %arg4[%c0_4, %c0_5] : memref<8x128xf32, #tpu.memory_space<vmem>>, vector<8x128xf32>
    tpu.vector_store %arg4[%c0_4, %c0_5], %13 {strides = array<i32>} : memref<8x128xf32, #tpu.memory_space<vmem>>, vector<8x128xf32>,
    return
  }
  func.func @transform_0(%arg0: i32) -> i32 {
    %c0_i32 = arith.constant 0 : i32
    %c0_i32_0 = arith.constant 0 : i32
    return %c0_i32 : i32
  }
  func.func @transform_1(%arg0: i32) -> (i32, i32) {
    %c0_i32 = arith.constant 0 : i32
    %c0_i32_0 = arith.constant 0 : i32
    return %arg0, %c0_i32 : i32, i32
  }
  func.func @transform_2(%arg0: i32) -> (i32, i32) {
    %c0_i32 = arith.constant 0 : i32
    %c0_i32_0 = arith.constant 0 : i32
    return %arg0, %c0_i32 : i32, i32
  }
  func.func @transform_3(%arg0: i32) -> (i32, i32) {
    %c0_i32 = arith.constant 0 : i32
    %c0_i32_0 = arith.constant 0 : i32
    return %arg0, %c0_i32 : i32, i32
  }
}

</mosaic_0001>

<llo_original>
// kernel: tpu_custom_call.1
$region0: #{tpu_custom_call.1}
  #allocation0 [shape = 'u32[]', space=smem, size = 0x4, offset = 0x4, fixed_abs, tag = 'smem constant byte address 0x4 - core index']
  #allocation1 [shape = 'u32[144,128]{1,0:T(1,128)}', space=vmem, size = 0x12000, scoped, tag = 'internal scratch']
  %s0 = inlined_call_operand.hbm [shape: f32[2], index: 0, kind: input, shape index: {}]
  %s1 = inlined_call_operand.hbm [shape: f32[8,128], index: 1, kind: input, shape index: {}]
  %s2 = inlined_call_operand.hbm [shape: f32[8,128], index: 2, kind: input, shape index: {}]
  %s3 = inlined_call_operand.hbm [shape: f32[8,128], index: 3, kind: output, shape index: {}]
  %s4 = sld [smem:[#allocation0]]
  $region34: #{tpu_custom_call.1} parent=0
    _
  %s6 = ssub.s32 1, %s4
  %s7 = scalar_select 0, %s6, %s4
  $region1: #{tpu_custom_call.1} parent=0
    #allocation2 [shape = 'u8[512]{0}', space=smem, size = 0x200, scoped, tag = 'input window, operand 0, single buffered']
    #allocation3 [shape = 's32[1]{0}', space=sflag, size = 0x4, scoped, tag = 'scoped memory for tpu_custom_call.1']
    #allocation4 [shape = 's32[1]{0}', space=sflag, size = 0x4, scoped, tag = 'scoped memory for tpu_custom_call.1']
    #allocation5 [shape = 's32[1]{0}', space=sflag, size = 0x4, scoped, tag = 'scoped memory for tpu_custom_call.1']
    #allocation6 [shape = 'u8[4096]{0}', space=vmem, size = 0x1000, scoped, tag = 'input window, operand 1, single buffered']
    #allocation7 [shape = 'u8[4096]{0}', space=vmem, size = 0x1000, scoped, tag = 'input window, operand 2, single buffered']
    #allocation8 [shape = 's32[1]{0}', space=sflag, size = 0x4, scoped, tag = 'scoped memory for tpu_custom_call.1']
    #allocation9 [shape = 'u8[4096]{0}', space=vmem, size = 0x1000, scoped, tag = 'output window, operand 0, single buffered']
    %8 = vsyncpa [#allocation5], 0
    %9 = vsyncpa [#allocation3], 0
    %10 = vsyncpa [#allocation8], 0
    %11 = vsyncpa [#allocation4], 0
    // Predicated region
    $region2: #{tpu_custom_call.1} parent=1 // pred_check
      _
    $region3: #{tpu_custom_call.1} parent=1 // pred_check_branch
      %13 = sbr.rel (0) target = $region5
    $region4: #{tpu_custom_call.1} parent=1 // pred_region
      %s15 = ssub.s32 16, 16
      %16 = vsyncadd [#allocation5], %s15
      %19 = dma.hbm_to_smem %s0, 16, [#allocation2], [#allocation5]
    $region5: #{tpu_custom_call.1} parent=1 // pred_fallthru
      _
    // Predicated region
    $region6: #{tpu_custom_call.1} parent=1 // pred_check
      _
    $region7: #{tpu_custom_call.1} parent=1 // pred_check_branch
      %21 = sbr.rel (0) target = $region9
    $region8: #{tpu_custom_call.1} parent=1 // pred_region
      %s23 = ssub.s32 128, 128
      %24 = vsyncadd [#allocation3], %s23
      %s26 = sshll.u32 [#allocation6], 4
      %s27 = int_to_ptr.vmem [resolvable:$true] %s26
      %29 = dma.hbm_to_vmem [thread:$0]  %s1, 128, %s27, [#allocation3]
    $region9: #{tpu_custom_call.1} parent=1 // pred_fallthru
      _
    // Predicated region
    $region10: #{tpu_custom_call.1} parent=1 // pred_check
      _
    $region11: #{tpu_custom_call.1} parent=1 // pred_check_branch
      %31 = sbr.rel (0) target = $region13
    $region12: #{tpu_custom_call.1} parent=1 // pred_region
      %s33 = ssub.s32 128, 128
      %34 = vsyncadd [#allocation8], %s33
      %s36 = sshll.u32 [#allocation7], 4
      %s37 = int_to_ptr.vmem [resolvable:$true] %s36
      %39 = dma.hbm_to_vmem [thread:$0]  %s2, 128, %s37, [#allocation8]
    $region13: #{tpu_custom_call.1} parent=1 // pred_fallthru
      _
    // Predicated region
    $region14: #{tpu_custom_call.1} parent=1 // pred_check
      _
    $region15: #{tpu_custom_call.1} parent=1 // pred_check_branch
      %41 = sbr.rel (0) target = $region17
    $region16: #{tpu_custom_call.1} parent=1 // pred_region
      %42 = dma.done [#allocation5], 16
    $region17: #{tpu_custom_call.1} parent=1 // pred_fallthru
      _
    // Predicated region
    $region18: #{tpu_custom_call.1} parent=1 // pred_check
      _
    $region19: #{tpu_custom_call.1} parent=1 // pred_check_branch
      %44 = sbr.rel (0) target = $region21
    $region20: #{tpu_custom_call.1} parent=1 // pred_region
      %45 = dma.done [#allocation3], 128
    $region21: #{tpu_custom_call.1} parent=1 // pred_fallthru
      _
    // Predicated region
    $region22: #{tpu_custom_call.1} parent=1 // pred_check
      _
    $region23: #{tpu_custom_call.1} parent=1 // pred_check_branch
      %47 = sbr.rel (0) target = $region25
    $region24: #{tpu_custom_call.1} parent=1 // pred_region
      %48 = dma.done [#allocation8], 128
    $region25: #{tpu_custom_call.1} parent=1 // pred_fallthru
      _
    %49 = sfence
    %s50 = sld [smem:[#allocation2]]
    %s51 = sld [smem:[#allocation2 + $0x1]]
    %v52 = vld [vmem:[#allocation7] sm:$0xff]
    %v53 = vld [vmem:[#allocation6] sm:$0xff]
    %v54 = vstv %s50
    %v55 = vmul.f32 %v52, %v54
    %v56 = vstv %s51
    %v57 = vadd.f32 %v55, %v56
    %v58 = vxor.u32 %v57, 2147483648
    %v59 = vmul.f32 %v58, 1.442695
    %v60 = vpow.pop %v59
    %v61 = vadd.f32 %v60, 1.0
    %v62 = vrcp.pop %v61
    %v63 = vmul.f32 1.0, %v62
    %v64 = vmul.f32 %v63, %v53
    %65 = vst [vmem:[#allocation9] sm:$0xff] %v64
    // Predicated region
    $region26: #{tpu_custom_call.1} parent=1 // pred_check
      _
    $region27: #{tpu_custom_call.1} parent=1 // pred_check_branch
      %67 = sbr.rel (0) target = $region29
    $region28: #{tpu_custom_call.1} parent=1 // pred_region
      %s69 = ssub.s32 128, 128
      %70 = vsyncadd [#allocation4], %s69
      %s72 = sshll.u32 [#allocation9], 4
      %s73 = int_to_ptr.vmem [resolvable:$true] %s72
      %75 = dma.vmem_to_hbm [thread:$0]  %s73, 128, %s3, [#allocation4]
    $region29: #{tpu_custom_call.1} parent=1 // pred_fallthru
      _
    // Predicated region
    $region30: #{tpu_custom_call.1} parent=1 // pred_check
      _
    $region31: #{tpu_custom_call.1} parent=1 // pred_check_branch
      %77 = sbr.rel (0) target = $region33
    $region32: #{tpu_custom_call.1} parent=1 // pred_region
      %78 = dma.done [#allocation4], 128
    $region33: #{tpu_custom_call.1} parent=1 // pred_fallthru
      _
    %79 = vsyncpa [#allocation3], 1
    %80 = vsyncpa [#allocation8], 1
    %81 = vsyncpa [#allocation4], 1
    %82 = vsyncpa [#allocation5], 1

</llo_original>
